<compile_context>
chip_gen: v6e
topology: v6e:2x2x1
jax: 0.10.0
libtpu: 0.0.40
codegen_flags: <defaults>
</compile_context>

<pallas_src>
import functools

import jax
import jax.numpy as jnp
from jax.experimental import pallas as pl
from jax.experimental.pallas import tpu as pltpu

NEG_SLOPE = 0.01   # torch.nn.LeakyReLU default
LN_EPS = 1e-5      # torch.nn.LayerNorm default
_LANE = 128
_SUBLANE = 8


def _round_up(x, m):
    return (x + m - 1) // m * m


def _leaky_relu(v):
    return jnp.where(v > 0, v, NEG_SLOPE * v)


def _masked_layer_norm(h, gamma, beta, mask, n_true):
    """LayerNorm over the first `n_true` lanes of a lane-padded activation.

    Padded lanes of `h` are zero on entry; gamma/beta are zero-padded so the
    padded lanes remain exactly zero on exit.
    """
    h = h * mask                                    # defensive; padded lanes already 0
    inv_n = 1.0 / float(n_true)
    mu = jnp.sum(h, axis=-1, keepdims=True) * inv_n
    diff = (h - mu) * mask
    var = jnp.sum(diff * diff, axis=-1, keepdims=True) * inv_n
    return (h - mu) * jax.lax.rsqrt(var + LN_EPS) * gamma + beta


def _regressor_kernel(
    x_ref,
    w1_ref, b1_ref, g1_ref, be1_ref,
    w2_ref, b2_ref, g2_ref, be2_ref,
    w3_ref, b3_ref, g3_ref, be3_ref,
    wo_ref, bo_ref,
    o_ref,
    h_ref,                       # VMEM scratch: (TB, H_pad) f32 hidden activations
    *, hidden_true,
):
    j = pl.program_id(1)         # vocab-tile index (inner, "arbitrary" axis)

    # Hidden stack: computed once per batch tile (first vocab tile), cached.
    @pl.when(j == 0)
    def _compute_hidden():
        h_pad = h_ref.shape[-1]
        lane = jax.lax.broadcasted_iota(jnp.int32, (1, h_pad), 1)
        mask = (lane < hidden_true).astype(jnp.float32)
        cdt = w2_ref.dtype       # bf16 compute dtype for MXU operands

        # Block 1: Linear(T*C -> H) -> LeakyReLU -> LayerNorm
        h = jnp.dot(x_ref[...], w1_ref[...], preferred_element_type=jnp.float32)
        h = _masked_layer_norm(_leaky_relu(h + b1_ref[...]),
                               g1_ref[...], be1_ref[...], mask, hidden_true)

        # Hidden block 1
        h = jnp.dot(h.astype(cdt), w2_ref[...], preferred_element_type=jnp.float32)
        h = _masked_layer_norm(_leaky_relu(h + b2_ref[...]),
                               g2_ref[...], be2_ref[...], mask, hidden_true)

        # Hidden block 2
        h = jnp.dot(h.astype(cdt), w3_ref[...], preferred_element_type=jnp.float32)
        h = _masked_layer_norm(_leaky_relu(h + b3_ref[...]),
                               g3_ref[...], be3_ref[...], mask, hidden_true)

        h_ref[...] = h

    # Output head for this vocab tile: Linear(H -> TV) -> LeakyReLU
    y = jnp.dot(h_ref[...].astype(wo_ref.dtype), wo_ref[...],
                preferred_element_type=jnp.float32) + bo_ref[...]
    o_ref[...] = _leaky_relu(y).astype(o_ref.dtype)


def init_params(key, ctx_size, embed_size, vocab_size,
                n_hidden_layers=2, hidden_size=64):
    """Synthetic init mirroring the PyTorch module's shapes.

    Linear weights stored pre-transposed as (in_features, out_features);
    biases / LayerNorm params as 1-D (D,).
    """
    assert n_hidden_layers == 2, "kernel is specialized for n_hidden_layers=2"
    in_dim = ctx_size * embed_size
    keys = jax.random.split(key, 4)

    def linear(k, fan_in, fan_out):
        kw, kb = jax.random.split(k)
        bound = 1.0 / float(fan_in) ** 0.5
        w = jax.random.uniform(kw, (fan_in, fan_out), jnp.float32, -bound, bound)
        b = jax.random.uniform(kb, (fan_out,), jnp.float32, -bound, bound)
        return w, b

    w1, b1 = linear(keys[0], in_dim, hidden_size)
    w2, b2 = linear(keys[1], hidden_size, hidden_size)
    w3, b3 = linear(keys[2], hidden_size, hidden_size)
    wo, bo = linear(keys[3], hidden_size, vocab_size)
    ones = jnp.ones((hidden_size,), jnp.float32)
    zeros = jnp.zeros((hidden_size,), jnp.float32)
    return (w1, b1, ones, zeros,
            w2, b2, ones, zeros,
            w3, b3, ones, zeros,
            wo, bo)


def pack_params(params, compute_dtype=jnp.bfloat16):
    """Pad every feature dim to a multiple of 128 and cast matmul weights to bf16.

    Zero padding keeps the math exact: padded weight rows/cols, biases and
    LayerNorm gamma/beta are zero, so padded lanes carry exact zeros.
    """
    (w1, b1, g1, be1, w2, b2, g2, be2, w3, b3, g3, be3, wo, bo) = params
    in_dim, hidden = w1.shape
    vocab = wo.shape[1]

    in_pad = _round_up(in_dim, _LANE)
    h_pad = _round_up(hidden, _LANE)
    v_pad = _round_up(vocab, _LANE)
    # Vocab tile: lane-dense, capped so the (TB, TV) f32 output tile stays
    # small enough for v7x's 64 MiB VMEM even at large vocab sizes.
    tv = v_pad if v_pad <= 2048 else 2048
    v_pad = _round_up(v_pad, tv)

    def pad_w(w, rows, cols):
        return jnp.pad(w, ((0, rows - w.shape[0]), (0, cols - w.shape[1]))
                       ).astype(compute_dtype)

    def pad_v(v, cols):
        return jnp.pad(v, (0, cols - v.shape[0])).reshape(1, cols).astype(jnp.float32)

    arrays = (
        pad_w(w1, in_pad, h_pad), pad_v(b1, h_pad), pad_v(g1, h_pad), pad_v(be1, h_pad),
        pad_w(w2, h_pad, h_pad), pad_v(b2, h_pad), pad_v(g2, h_pad), pad_v(be2, h_pad),
        pad_w(w3, h_pad, h_pad), pad_v(b3, h_pad), pad_v(g3, h_pad), pad_v(be3, h_pad),
        pad_w(wo, h_pad, v_pad), pad_v(bo, v_pad),
    )
    return dict(arrays=arrays,
                in_dim=in_dim, in_pad=in_pad,
                hidden_size=hidden, hidden_pad=h_pad,
                vocab_size=vocab, vocab_pad=v_pad, tv=tv,
                compute_dtype=compute_dtype)


def _vmem_bytes(tb, in_pad, h_pad, tv, cdt_bytes):
    dbl = 2  # double buffering
    x_tile = dbl * tb * in_pad * cdt_bytes
    out_tile = dbl * tb * tv * 4
    wo_tile = dbl * h_pad * tv * cdt_bytes
    w_resident = (in_pad * h_pad + 2 * h_pad * h_pad) * cdt_bytes
    vectors = 9 * h_pad * 4 + dbl * tv * 4
    scratch = tb * h_pad * 4
    return x_tile + out_tile + wo_tile + w_resident + vectors + scratch


def gene_expression_regressor(x_emb, packed):
    """x_emb: (B, T, C) float32.  Returns (B, vocab_size) float32."""
    B, T, C = x_emb.shape
    in_dim = packed["in_dim"]
    assert T * C == in_dim, (T * C, in_dim)
    in_pad = packed["in_pad"]
    h_pad = packed["hidden_pad"]
    v_pad = packed["vocab_pad"]
    tv = packed["tv"]
    vocab = packed["vocab_size"]
    cdt = packed["compute_dtype"]
    arrays = packed["arrays"]

    # Batch tile: sublane-full (multiple of 8), up to 256 rows per grid step.
    tb = 256 if B >= 256 else max(_SUBLANE, _round_up(B, _SUBLANE))
    b_pad = _round_up(B, tb)

    # Lane-dense, sublane-full, zero-padded activation slab (bf16 -> half HBM traffic).
    x = x_emb.reshape(B, in_dim).astype(cdt)
    x = jnp.pad(x, ((0, b_pad - B), (0, in_pad - in_dim)))

    grid = (b_pad // tb, v_pad // tv)

    def _const(shape):
        return pl.BlockSpec(shape, lambda i, j: (0, 0))

    in_specs = [
        pl.BlockSpec((tb, in_pad), lambda i, j: (i, 0)),          # x: batch-tiled
        _const((in_pad, h_pad)), _const((1, h_pad)), _const((1, h_pad)), _const((1, h_pad)),
        _const((h_pad, h_pad)), _const((1, h_pad)), _const((1, h_pad)), _const((1, h_pad)),
        _const((h_pad, h_pad)), _const((1, h_pad)), _const((1, h_pad)), _const((1, h_pad)),
        pl.BlockSpec((h_pad, tv), lambda i, j: (0, j)),           # wo: vocab-tiled
        pl.BlockSpec((1, tv), lambda i, j: (0, j)),               # bo: vocab-tiled
    ]
    out_specs = pl.BlockSpec((tb, tv), lambda i, j: (i, j))

    flops = 2 * b_pad * (in_pad * h_pad + 2 * h_pad * h_pad + h_pad * v_pad)
    bytes_accessed = (x.size * x.dtype.itemsize
                      + sum(a.size * a.dtype.itemsize for a in arrays)
                      + b_pad * v_pad * 4)
    cost = pl.CostEstimate(flops=flops, transcendentals=3 * b_pad,
                           bytes_accessed=bytes_accessed)

    # Raise the scoped-VMEM limit when tiles need it (cap: safe on v7x's 64 MiB).
    vmem_need = _vmem_bytes(tb, in_pad, h_pad, tv, jnp.dtype(cdt).itemsize)
    vmem_limit = min(max(int(vmem_need * 1.5), 32 * 1024 * 1024), 64 * 1024 * 1024)

    kernel = functools.partial(_regressor_kernel, hidden_true=packed["hidden_size"])

    out_padded = pl.pallas_call(
        kernel,
        out_shape=jax.ShapeDtypeStruct((b_pad, v_pad), jnp.float32),
        grid_spec=pltpu.PrefetchScalarGridSpec(
            num_scalar_prefetch=0,
            grid=grid,
            in_specs=in_specs,
            out_specs=out_specs,
            scratch_shapes=[pltpu.VMEM((tb, h_pad), jnp.float32)],
        ),
        compiler_params=pltpu.CompilerParams(
            dimension_semantics=("parallel", "arbitrary"),
            vmem_limit_bytes=vmem_limit,
        ),
        cost_estimate=cost,
    )(x, *arrays)

    return out_padded[:B, :vocab]


def _reference(x_emb, params, compute_dtype=jnp.bfloat16):
    """Pure-JAX reference with the same bf16-matmul / f32-epilogue recipe."""
    B, T, C = x_emb.shape
    h = x_emb.reshape(B, T * C)
    (w1, b1, g1, be1, w2, b2, g2, be2, w3, b3, g3, be3, wo, bo) = params
    for (w, b, g, be) in ((w1, b1, g1, be1), (w2, b2, g2, be2), (w3, b3, g3, be3)):
        h = jnp.dot(h.astype(compute_dtype), w.astype(compute_dtype),
                    preferred_element_type=jnp.float32) + b
        h = jnp.where(h > 0, h, NEG_SLOPE * h)
        mu = jnp.mean(h, axis=-1, keepdims=True)
        var = jnp.mean((h - mu) ** 2, axis=-1, keepdims=True)
        h = (h - mu) / jnp.sqrt(var + LN_EPS) * g + be
    y = jnp.dot(h.astype(compute_dtype), wo.astype(compute_dtype),
                preferred_element_type=jnp.float32) + bo
    return jnp.where(y > 0, y, NEG_SLOPE * y)


if __name__ == "__main__":
    # Small shapes consistent with the module's forward: (B, T, C) input.
    B, ctx_size, embed_size = 4, 8, 4          # T=8, C=4 -> flattened dim 32
    hidden_size, vocab_size = 64, 48           # module default hidden_size=64
    n_hidden_layers = 2

    key = jax.random.PRNGKey(0)
    k_x, k_p = jax.random.split(key)
    x_emb = jax.random.normal(k_x, (B, ctx_size, embed_size), jnp.float32)

    params = init_params(k_p, ctx_size, embed_size, vocab_size,
                         n_hidden_layers=n_hidden_layers,
                         hidden_size=hidden_size)
    packed = pack_params(params)

    out = gene_expression_regressor(x_emb, packed)
    out = jax.block_until_ready(out)

    ref = _reference(x_emb, params, compute_dtype=packed["compute_dtype"])
    assert out.shape == (B, vocab_size), out.shape
    max_err = float(jnp.max(jnp.abs(out - ref)))
    assert jnp.allclose(out, ref, atol=1e-2, rtol=1e-2), max_err

    print("KERNEL_OK")
</pallas_src>

<mosaic_0001>
module attributes {stable_mosaic.version = 11 : i64} {
  func.func @_regressor_kernel(%arg0: i32, %arg1: i32, %arg2: memref<8x128xbf16, #tpu.memory_space<vmem>>, %arg3: memref<128x128xbf16, #tpu.memory_space<vmem>>, %arg4: memref<1x128xf32, #tpu.memory_space<vmem>>, %arg5: memref<1x128xf32, #tpu.memory_space<vmem>>, %arg6: memref<1x128xf32, #tpu.memory_space<vmem>>, %arg7: memref<128x128xbf16, #tpu.memory_space<vmem>>, %arg8: memref<1x128xf32, #tpu.memory_space<vmem>>, %arg9: memref<1x128xf32, #tpu.memory_space<vmem>>, %arg10: memref<1x128xf32, #tpu.memory_space<vmem>>, %arg11: memref<128x128xbf16, #tpu.memory_space<vmem>>, %arg12: memref<1x128xf32, #tpu.memory_space<vmem>>, %arg13: memref<1x128xf32, #tpu.memory_space<vmem>>, %arg14: memref<1x128xf32, #tpu.memory_space<vmem>>, %arg15: memref<128x128xbf16, #tpu.memory_space<vmem>>, %arg16: memref<1x128xf32, #tpu.memory_space<vmem>>, %arg17: memref<8x128xf32, #tpu.memory_space<vmem>>, %arg18: memref<8x128xf32, #tpu.memory_space<vmem>>) attributes {dimension_semantics = [#tpu.dimension_semantics<parallel>, #tpu.dimension_semantics<arbitrary>], iteration_bounds = array<i64: 1, 1>, scalar_prefetch = 0 : i64, scratch_operands = 1 : i64, tpu.core_type = #tpu.core_type<tc>, window_params = [{transform_indices = @transform_0, window_bounds = array<i64: 8, 128>}, {pipeline_mode = #tpu.pipeline_mode<synchronous>, transform_indices = @transform_1, window_bounds = array<i64: 128, 128>}, {pipeline_mode = #tpu.pipeline_mode<synchronous>, transform_indices = @transform_2, window_bounds = array<i64: 1, 128>}, {pipeline_mode = #tpu.pipeline_mode<synchronous>, transform_indices = @transform_3, window_bounds = array<i64: 1, 128>}, {pipeline_mode = #tpu.pipeline_mode<synchronous>, transform_indices = @transform_4, window_bounds = array<i64: 1, 128>}, {pipeline_mode = #tpu.pipeline_mode<synchronous>, transform_indices = @transform_5, window_bounds = array<i64: 128, 128>}, {pipeline_mode = #tpu.pipeline_mode<synchronous>, transform_indices = @transform_6, window_bounds = array<i64: 1, 128>}, {pipeline_mode = #tpu.pipeline_mode<synchronous>, transform_indices = @transform_7, window_bounds = array<i64: 1, 128>}, {pipeline_mode = #tpu.pipeline_mode<synchronous>, transform_indices = @transform_8, window_bounds = array<i64: 1, 128>}, {pipeline_mode = #tpu.pipeline_mode<synchronous>, transform_indices = @transform_9, window_bounds = array<i64: 128, 128>}, {pipeline_mode = #tpu.pipeline_mode<synchronous>, transform_indices = @transform_10, window_bounds = array<i64: 1, 128>}, {pipeline_mode = #tpu.pipeline_mode<synchronous>, transform_indices = @transform_11, window_bounds = array<i64: 1, 128>}, {pipeline_mode = #tpu.pipeline_mode<synchronous>, transform_indices = @transform_12, window_bounds = array<i64: 1, 128>}, {transform_indices = @transform_13, window_bounds = array<i64: 128, 128>}, {transform_indices = @transform_14, window_bounds = array<i64: 1, 128>}, {transform_indices = @transform_15, window_bounds = array<i64: 8, 128>}]} {
    %c0_i32 = arith.constant 0 : i32
    %0 = arith.cmpi eq, %arg1, %c0_i32 : i32
    %1 = arith.extui %0 : i1 to i32
    %c0_i32_0 = arith.constant 0 : i32
    %2 = arith.cmpi ne, %1, %c0_i32_0 : i32
    scf.if %2 {
      %16 = tpu.iota {dimensions = array<i32: 1>} : vector<1x128xi32>
      %c64_i32 = arith.constant 64 : i32
      %17 = vector.broadcast %c64_i32 : i32 to vector<1x128xi32>
      %18 = arith.cmpi slt, %16, %17 : vector<1x128xi32>
      %19 = arith.extui %18 : vector<1x128xi1> to vector<1x128xi32>
      %20 = arith.sitofp %19 : vector<1x128xi32> to vector<1x128xf32>
      %c0_10 = arith.constant 0 : index
      %c0_11 = arith.constant 0 : index
      %21 = vector.load %arg2[%c0_10, %c0_11] : memref<8x128xbf16, #tpu.memory_space<vmem>>, vector<8x128xbf16>
      %c0_12 = arith.constant 0 : index
      %c0_13 = arith.constant 0 : index
      %22 = vector.load %arg3[%c0_12, %c0_13] : memref<128x128xbf16, #tpu.memory_space<vmem>>, vector<128x128xbf16>
      %cst_14 = arith.constant dense<0.000000e+00> : vector<8x128xf32>
      %23 = tpu.matmul %21, %22, %cst_14 {dimension_numbers = #tpu.dot_dimension_numbers<[1], [0], [0], [1], [0, 0, 1, 1], [], []>} : vector<8x128xbf16>, vector<128x128xbf16>, vector<8x128xf32> -> vector<8x128xf32>
      %c0_15 = arith.constant 0 : index
      %c0_16 = arith.constant 0 : index
      %24 = vector.load %arg4[%c0_15, %c0_16] : memref<1x128xf32, #tpu.memory_space<vmem>>, vector<1x128xf32>
      %25 = vector.broadcast %24 : vector<1x128xf32> to vector<8x128xf32>
      %26 = arith.addf %23, %25 : vector<8x128xf32>
      %cst_17 = arith.constant 0.000000e+00 : f32
      %27 = vector.broadcast %cst_17 : f32 to vector<8x128xf32>
      %28 = arith.cmpf ogt, %26, %27 : vector<8x128xf32>
      %cst_18 = arith.constant 0.00999999977 : f32
      %29 = vector.broadcast %cst_18 : f32 to vector<8x128xf32>
      %30 = arith.mulf %29, %26 : vector<8x128xf32>
      %31 = arith.select %28, %26, %30 : vector<8x128xi1>, vector<8x128xf32>
      %c0_19 = arith.constant 0 : index
      %c0_20 = arith.constant 0 : index
      %32 = vector.load %arg5[%c0_19, %c0_20] : memref<1x128xf32, #tpu.memory_space<vmem>>, vector<1x128xf32>
      %c0_21 = arith.constant 0 : index
      %c0_22 = arith.constant 0 : index
      %33 = vector.load %arg6[%c0_21, %c0_22] : memref<1x128xf32, #tpu.memory_space<vmem>>, vector<1x128xf32>
      %34 = vector.broadcast %20 : vector<1x128xf32> to vector<8x128xf32>
      %35 = arith.mulf %31, %34 : vector<8x128xf32>
      %cst_23 = arith.constant dense<0.000000e+00> : vector<8xf32>
      %36 = vector.multi_reduction <add>, %35, %cst_23 [1] : vector<8x128xf32> to vector<8xf32>
      %37 = vector.shape_cast %36 : vector<8xf32> to vector<8x1xf32>
      %cst_24 = arith.constant 1.562500e-02 : f32
      %38 = vector.broadcast %cst_24 : f32 to vector<8x1xf32>
      %39 = arith.mulf %37, %38 : vector<8x1xf32>
      %40 = vector.broadcast %39 : vector<8x1xf32> to vector<8x128xf32>
      %41 = arith.subf %35, %40 : vector<8x128xf32>
      %42 = vector.broadcast %20 : vector<1x128xf32> to vector<8x128xf32>
      %43 = arith.mulf %41, %42 : vector<8x128xf32>
      %44 = arith.mulf %43, %43 : vector<8x128xf32>
      %cst_25 = arith.constant dense<0.000000e+00> : vector<8xf32>
      %45 = vector.multi_reduction <add>, %44, %cst_25 [1] : vector<8x128xf32> to vector<8xf32>
      %46 = vector.shape_cast %45 : vector<8xf32> to vector<8x1xf32>
      %cst_26 = arith.constant 1.562500e-02 : f32
      %47 = vector.broadcast %cst_26 : f32 to vector<8x1xf32>
      %48 = arith.mulf %46, %47 : vector<8x1xf32>
      %49 = vector.broadcast %39 : vector<8x1xf32> to vector<8x128xf32>
      %50 = arith.subf %35, %49 : vector<8x128xf32>
      %cst_27 = arith.constant 9.99999974E-6 : f32
      %51 = vector.broadcast %cst_27 : f32 to vector<8x1xf32>
      %52 = arith.addf %48, %51 : vector<8x1xf32>
      %53 = math.rsqrt %52 : vector<8x1xf32>
      %54 = vector.broadcast %53 : vector<8x1xf32> to vector<8x128xf32>
      %55 = arith.mulf %50, %54 : vector<8x128xf32>
      %56 = vector.broadcast %32 : vector<1x128xf32> to vector<8x128xf32>
      %57 = arith.mulf %55, %56 : vector<8x128xf32>
      %58 = vector.broadcast %33 : vector<1x128xf32> to vector<8x128xf32>
      %59 = arith.addf %57, %58 : vector<8x128xf32>
      %60 = arith.truncf %59 : vector<8x128xf32> to vector<8x128xbf16>
      %c0_28 = arith.constant 0 : index
      %c0_29 = arith.constant 0 : index
      %61 = vector.load %arg7[%c0_28, %c0_29] : memref<128x128xbf16, #tpu.memory_space<vmem>>, vector<128x128xbf16>
      %cst_30 = arith.constant dense<0.000000e+00> : vector<8x128xf32>
      %62 = tpu.matmul %60, %61, %cst_30 {dimension_numbers = #tpu.dot_dimension_numbers<[1], [0], [0], [1], [0, 0, 1, 1], [], []>} : vector<8x128xbf16>, vector<128x128xbf16>, vector<8x128xf32> -> vector<8x128xf32>
      %c0_31 = arith.constant 0 : index
      %c0_32 = arith.constant 0 : index
      %63 = vector.load %arg8[%c0_31, %c0_32] : memref<1x128xf32, #tpu.memory_space<vmem>>, vector<1x128xf32>
      %64 = vector.broadcast %63 : vector<1x128xf32> to vector<8x128xf32>
      %65 = arith.addf %62, %64 : vector<8x128xf32>
      %cst_33 = arith.constant 0.000000e+00 : f32
      %66 = vector.broadcast %cst_33 : f32 to vector<8x128xf32>
      %67 = arith.cmpf ogt, %65, %66 : vector<8x128xf32>
      %cst_34 = arith.constant 0.00999999977 : f32
      %68 = vector.broadcast %cst_34 : f32 to vector<8x128xf32>
      %69 = arith.mulf %68, %65 : vector<8x128xf32>
      %70 = arith.select %67, %65, %69 : vector<8x128xi1>, vector<8x128xf32>
      %c0_35 = arith.constant 0 : index
      %c0_36 = arith.constant 0 : index
      %71 = vector.load %arg9[%c0_35, %c0_36] : memref<1x128xf32, #tpu.memory_space<vmem>>, vector<1x128xf32>
      %c0_37 = arith.constant 0 : index
      %c0_38 = arith.constant 0 : index
      %72 = vector.load %arg10[%c0_37, %c0_38] : memref<1x128xf32, #tpu.memory_space<vmem>>, vector<1x128xf32>
      %73 = vector.broadcast %20 : vector<1x128xf32> to vector<8x128xf32>
      %74 = arith.mulf %70, %73 : vector<8x128xf32>
      %cst_39 = arith.constant dense<0.000000e+00> : vector<8xf32>
      %75 = vector.multi_reduction <add>, %74, %cst_39 [1] : vector<8x128xf32> to vector<8xf32>
      %76 = vector.shape_cast %75 : vector<8xf32> to vector<8x1xf32>
      %cst_40 = arith.constant 1.562500e-02 : f32
      %77 = vector.broadcast %cst_40 : f32 to vector<8x1xf32>
      %78 = arith.mulf %76, %77 : vector<8x1xf32>
      %79 = vector.broadcast %78 : vector<8x1xf32> to vector<8x128xf32>
      %80 = arith.subf %74, %79 : vector<8x128xf32>
      %81 = vector.broadcast %20 : vector<1x128xf32> to vector<8x128xf32>
      %82 = arith.mulf %80, %81 : vector<8x128xf32>
      %83 = arith.mulf %82, %82 : vector<8x128xf32>
      %cst_41 = arith.constant dense<0.000000e+00> : vector<8xf32>
      %84 = vector.multi_reduction <add>, %83, %cst_41 [1] : vector<8x128xf32> to vector<8xf32>
      %85 = vector.shape_cast %84 : vector<8xf32> to vector<8x1xf32>
      %cst_42 = arith.constant 1.562500e-02 : f32
      %86 = vector.broadcast %cst_42 : f32 to vector<8x1xf32>
      %87 = arith.mulf %85, %86 : vector<8x1xf32>
      %88 = vector.broadcast %78 : vector<8x1xf32> to vector<8x128xf32>
      %89 = arith.subf %74, %88 : vector<8x128xf32>
      %cst_43 = arith.constant 9.99999974E-6 : f32
      %90 = vector.broadcast %cst_43 : f32 to vector<8x1xf32>
      %91 = arith.addf %87, %90 : vector<8x1xf32>
      %92 = math.rsqrt %91 : vector<8x1xf32>
      %93 = vector.broadcast %92 : vector<8x1xf32> to vector<8x128xf32>
      %94 = arith.mulf %89, %93 : vector<8x128xf32>
      %95 = vector.broadcast %71 : vector<1x128xf32> to vector<8x128xf32>
      %96 = arith.mulf %94, %95 : vector<8x128xf32>
      %97 = vector.broadcast %72 : vector<1x128xf32> to vector<8x128xf32>
      %98 = arith.addf %96, %97 : vector<8x128xf32>
      %99 = arith.truncf %98 : vector<8x128xf32> to vector<8x128xbf16>
      %c0_44 = arith.constant 0 : index
      %c0_45 = arith.constant 0 : index
      %100 = vector.load %arg11[%c0_44, %c0_45] : memref<128x128xbf16, #tpu.memory_space<vmem>>, vector<128x128xbf16>
      %cst_46 = arith.constant dense<0.000000e+00> : vector<8x128xf32>
      %101 = tpu.matmul %99, %100, %cst_46 {dimension_numbers = #tpu.dot_dimension_numbers<[1], [0], [0], [1], [0, 0, 1, 1], [], []>} : vector<8x128xbf16>, vector<128x128xbf16>, vector<8x128xf32> -> vector<8x128xf32>
      %c0_47 = arith.constant 0 : index
      %c0_48 = arith.constant 0 : index
      %102 = vector.load %arg12[%c0_47, %c0_48] : memref<1x128xf32, #tpu.memory_space<vmem>>, vector<1x128xf32>
      %103 = vector.broadcast %102 : vector<1x128xf32> to vector<8x128xf32>
      %104 = arith.addf %101, %103 : vector<8x128xf32>
      %cst_49 = arith.constant 0.000000e+00 : f32
      %105 = vector.broadcast %cst_49 : f32 to vector<8x128xf32>
      %106 = arith.cmpf ogt, %104, %105 : vector<8x128xf32>
      %cst_50 = arith.constant 0.00999999977 : f32
      %107 = vector.broadcast %cst_50 : f32 to vector<8x128xf32>
      %108 = arith.mulf %107, %104 : vector<8x128xf32>
      %109 = arith.select %106, %104, %108 : vector<8x128xi1>, vector<8x128xf32>
      %c0_51 = arith.constant 0 : index
      %c0_52 = arith.constant 0 : index
      %110 = vector.load %arg13[%c0_51, %c0_52] : memref<1x128xf32, #tpu.memory_space<vmem>>, vector<1x128xf32>
      %c0_53 = arith.constant 0 : index
      %c0_54 = arith.constant 0 : index
      %111 = vector.load %arg14[%c0_53, %c0_54] : memref<1x128xf32, #tpu.memory_space<vmem>>, vector<1x128xf32>
      %112 = vector.broadcast %20 : vector<1x128xf32> to vector<8x128xf32>
      %113 = arith.mulf %109, %112 : vector<8x128xf32>
      %cst_55 = arith.constant dense<0.000000e+00> : vector<8xf32>
      %114 = vector.multi_reduction <add>, %113, %cst_55 [1] : vector<8x128xf32> to vector<8xf32>
      %115 = vector.shape_cast %114 : vector<8xf32> to vector<8x1xf32>
      %cst_56 = arith.constant 1.562500e-02 : f32
      %116 = vector.broadcast %cst_56 : f32 to vector<8x1xf32>
      %117 = arith.mulf %115, %116 : vector<8x1xf32>
      %118 = vector.broadcast %117 : vector<8x1xf32> to vector<8x128xf32>
      %119 = arith.subf %113, %118 : vector<8x128xf32>
      %120 = vector.broadcast %20 : vector<1x128xf32> to vector<8x128xf32>
      %121 = arith.mulf %119, %120 : vector<8x128xf32>
      %122 = arith.mulf %121, %121 : vector<8x128xf32>
      %cst_57 = arith.constant dense<0.000000e+00> : vector<8xf32>
      %123 = vector.multi_reduction <add>, %122, %cst_57 [1] : vector<8x128xf32> to vector<8xf32>
      %124 = vector.shape_cast %123 : vector<8xf32> to vector<8x1xf32>
      %cst_58 = arith.constant 1.562500e-02 : f32
      %125 = vector.broadcast %cst_58 : f32 to vector<8x1xf32>
      %126 = arith.mulf %124, %125 : vector<8x1xf32>
      %127 = vector.broadcast %117 : vector<8x1xf32> to vector<8x128xf32>
      %128 = arith.subf %113, %127 : vector<8x128xf32>
      %cst_59 = arith.constant 9.99999974E-6 : f32
      %129 = vector.broadcast %cst_59 : f32 to vector<8x1xf32>
      %130 = arith.addf %126, %129 : vector<8x1xf32>
      %131 = math.rsqrt %130 : vector<8x1xf32>
      %132 = vector.broadcast %131 : vector<8x1xf32> to vector<8x128xf32>
      %133 = arith.mulf %128, %132 : vector<8x128xf32>
      %134 = vector.broadcast %110 : vector<1x128xf32> to vector<8x128xf32>
      %135 = arith.mulf %133, %134 : vector<8x128xf32>
      %136 = vector.broadcast %111 : vector<1x128xf32> to vector<8x128xf32>
      %137 = arith.addf %135, %136 : vector<8x128xf32>
      %c0_60 = arith.constant 0 : index
      %c0_61 = arith.constant 0 : index
      %138 = vector.load %arg18[%c0_60, %c0_61] : memref<8x128xf32, #tpu.memory_space<vmem>>, vector<8x128xf32>
      tpu.vector_store %arg18[%c0_60, %c0_61], %137 {strides = array<i32>} : memref<8x128xf32, #tpu.memory_space<vmem>>, vector<8x128xf32>,
    } else {
    }
    %c0 = arith.constant 0 : index
    %c0_1 = arith.constant 0 : index
    %3 = vector.load %arg18[%c0, %c0_1] : memref<8x128xf32, #tpu.memory_space<vmem>>, vector<8x128xf32>
    %4 = arith.truncf %3 : vector<8x128xf32> to vector<8x128xbf16>
    %c0_2 = arith.constant 0 : index
    %c0_3 = arith.constant 0 : index
    %5 = vector.load %arg15[%c0_2, %c0_3] : memref<128x128xbf16, #tpu.memory_space<vmem>>, vector<128x128xbf16>
    %cst = arith.constant dense<0.000000e+00> : vector<8x128xf32>
    %6 = tpu.matmul %4, %5, %cst {dimension_numbers = #tpu.dot_dimension_numbers<[1], [0], [0], [1], [0, 0, 1, 1], [], []>} : vector<8x128xbf16>, vector<128x128xbf16>, vector<8x128xf32> -> vector<8x128xf32>
    %c0_4 = arith.constant 0 : index
    %c0_5 = arith.constant 0 : index
    %7 = vector.load %arg16[%c0_4, %c0_5] : memref<1x128xf32, #tpu.memory_space<vmem>>, vector<1x128xf32>
    %8 = vector.broadcast %7 : vector<1x128xf32> to vector<8x128xf32>
    %9 = arith.addf %6, %8 : vector<8x128xf32>
    %cst_6 = arith.constant 0.000000e+00 : f32
    %10 = vector.broadcast %cst_6 : f32 to vector<8x128xf32>
    %11 = arith.cmpf ogt, %9, %10 : vector<8x128xf32>
    %cst_7 = arith.constant 0.00999999977 : f32
    %12 = vector.broadcast %cst_7 : f32 to vector<8x128xf32>
    %13 = arith.mulf %12, %9 : vector<8x128xf32>
    %14 = arith.select %11, %9, %13 : vector<8x128xi1>, vector<8x128xf32>
    %c0_8 = arith.constant 0 : index
    %c0_9 = arith.constant 0 : index
    %15 = vector.load %arg17[%c0_8, %c0_9] : memref<8x128xf32, #tpu.memory_space<vmem>>, vector<8x128xf32>
    tpu.vector_store %arg17[%c0_8, %c0_9], %14 {strides = array<i32>} : memref<8x128xf32, #tpu.memory_space<vmem>>, vector<8x128xf32>,
    return
  }
  func.func @transform_0(%arg0: i32, %arg1: i32) -> (i32, i32) {
    %c0_i32 = arith.constant 0 : i32
    %c0_i32_0 = arith.constant 0 : i32
    return %arg0, %c0_i32 : i32, i32
  }
  func.func @transform_1(%arg0: i32, %arg1: i32) -> (i32, i32) {
    %c0_i32 = arith.constant 0 : i32
    %c0_i32_0 = arith.constant 0 : i32
    %c0_i32_1 = arith.constant 0 : i32
    return %c0_i32, %c0_i32_0 : i32, i32
  }
  func.func @transform_2(%arg0: i32, %arg1: i32) -> (i32, i32) {
    %c0_i32 = arith.constant 0 : i32
    %c0_i32_0 = arith.constant 0 : i32
    %c0_i32_1 = arith.constant 0 : i32
    return %c0_i32, %c0_i32_0 : i32, i32
  }
  func.func @transform_3(%arg0: i32, %arg1: i32) -> (i32, i32) {
    %c0_i32 = arith.constant 0 : i32
    %c0_i32_0 = arith.constant 0 : i32
    %c0_i32_1 = arith.constant 0 : i32
    return %c0_i32, %c0_i32_0 : i32, i32
  }
  func.func @transform_4(%arg0: i32, %arg1: i32) -> (i32, i32) {
    %c0_i32 = arith.constant 0 : i32
    %c0_i32_0 = arith.constant 0 : i32
    %c0_i32_1 = arith.constant 0 : i32
    return %c0_i32, %c0_i32_0 : i32, i32
  }
  func.func @transform_5(%arg0: i32, %arg1: i32) -> (i32, i32) {
    %c0_i32 = arith.constant 0 : i32
    %c0_i32_0 = arith.constant 0 : i32
    %c0_i32_1 = arith.constant 0 : i32
    return %c0_i32, %c0_i32_0 : i32, i32
  }
  func.func @transform_6(%arg0: i32, %arg1: i32) -> (i32, i32) {
    %c0_i32 = arith.constant 0 : i32
    %c0_i32_0 = arith.constant 0 : i32
    %c0_i32_1 = arith.constant 0 : i32
    return %c0_i32, %c0_i32_0 : i32, i32
  }
  func.func @transform_7(%arg0: i32, %arg1: i32) -> (i32, i32) {
    %c0_i32 = arith.constant 0 : i32
    %c0_i32_0 = arith.constant 0 : i32
    %c0_i32_1 = arith.constant 0 : i32
    return %c0_i32, %c0_i32_0 : i32, i32
  }
  func.func @transform_8(%arg0: i32, %arg1: i32) -> (i32, i32) {
    %c0_i32 = arith.constant 0 : i32
    %c0_i32_0 = arith.constant 0 : i32
    %c0_i32_1 = arith.constant 0 : i32
    return %c0_i32, %c0_i32_0 : i32, i32
  }
  func.func @transform_9(%arg0: i32, %arg1: i32) -> (i32, i32) {
    %c0_i32 = arith.constant 0 : i32
    %c0_i32_0 = arith.constant 0 : i32
    %c0_i32_1 = arith.constant 0 : i32
    return %c0_i32, %c0_i32_0 : i32, i32
  }
  func.func @transform_10(%arg0: i32, %arg1: i32) -> (i32, i32) {
    %c0_i32 = arith.constant 0 : i32
    %c0_i32_0 = arith.constant 0 : i32
    %c0_i32_1 = arith.constant 0 : i32
    return %c0_i32, %c0_i32_0 : i32, i32
  }
  func.func @transform_11(%arg0: i32, %arg1: i32) -> (i32, i32) {
    %c0_i32 = arith.constant 0 : i32
    %c0_i32_0 = arith.constant 0 : i32
    %c0_i32_1 = arith.constant 0 : i32
    return %c0_i32, %c0_i32_0 : i32, i32
  }
  func.func @transform_12(%arg0: i32, %arg1: i32) -> (i32, i32) {
    %c0_i32 = arith.constant 0 : i32
    %c0_i32_0 = arith.constant 0 : i32
    %c0_i32_1 = arith.constant 0 : i32
    return %c0_i32, %c0_i32_0 : i32, i32
  }
  func.func @transform_13(%arg0: i32, %arg1: i32) -> (i32, i32) {
    %c0_i32 = arith.constant 0 : i32
    %c0_i32_0 = arith.constant 0 : i32
    return %c0_i32, %arg1 : i32, i32
  }
  func.func @transform_14(%arg0: i32, %arg1: i32) -> (i32, i32) {
    %c0_i32 = arith.constant 0 : i32
    %c0_i32_0 = arith.constant 0 : i32
    return %c0_i32, %arg1 : i32, i32
  }
  func.func @transform_15(%arg0: i32, %arg1: i32) -> (i32, i32) {
    %c0_i32 = arith.constant 0 : i32
    return %arg0, %arg1 : i32, i32
  }
}

</mosaic_0001>

<llo_original>
// kernel: tpu_custom_call.1
$region0: #{tpu_custom_call.1}
  #allocation0 [shape = 'u32[]', space=smem, size = 0x4, offset = 0x4, fixed_abs, tag = 'smem constant byte address 0x4 - core index']
  #allocation1 [shape = 'u32[144,128]{1,0:T(1,128)}', space=vmem, size = 0x12000, scoped, tag = 'internal scratch']
  #allocation2 [shape = 'f32[8,128]{1,0:T(8,128)}', space=vmem, size = 0x1000, scoped, tag = 'scratch operand']
  %s0 = inlined_call_operand.hbm [shape: bf16[8,128], index: 0, kind: input, shape index: {}]
  %s1 = inlined_call_operand.hbm [shape: bf16[128,128], index: 1, kind: input, shape index: {}]
  %s2 = inlined_call_operand.vmem [shape: f32[1,128], index: 2, kind: input, shape index: {}]
  %s3 = inlined_call_operand.vmem [shape: f32[1,128], index: 3, kind: input, shape index: {}]
  %s4 = inlined_call_operand.vmem [shape: f32[1,128], index: 4, kind: input, shape index: {}]
  %s5 = inlined_call_operand.hbm [shape: bf16[128,128], index: 5, kind: input, shape index: {}]
  %s6 = inlined_call_operand.vmem [shape: f32[1,128], index: 6, kind: input, shape index: {}]
  %s7 = inlined_call_operand.vmem [shape: f32[1,128], index: 7, kind: input, shape index: {}]
  %s8 = inlined_call_operand.vmem [shape: f32[1,128], index: 8, kind: input, shape index: {}]
  %s9 = inlined_call_operand.hbm [shape: bf16[128,128], index: 9, kind: input, shape index: {}]
  %s10 = inlined_call_operand.vmem [shape: f32[1,128], index: 10, kind: input, shape index: {}]
  %s11 = inlined_call_operand.vmem [shape: f32[1,128], index: 11, kind: input, shape index: {}]
  %s12 = inlined_call_operand.vmem [shape: f32[1,128], index: 12, kind: input, shape index: {}]
  %s13 = inlined_call_operand.hbm [shape: bf16[128,128], index: 13, kind: input, shape index: {}]
  %s14 = inlined_call_operand.vmem [shape: f32[1,128], index: 14, kind: input, shape index: {}]
  %s15 = inlined_call_operand.hbm [shape: f32[8,128], index: 15, kind: output, shape index: {}]
  %s16 = sld [smem:[#allocation0]]
  $region94: #{tpu_custom_call.1} parent=0
    _
  %s18 = ssub.s32 1, %s16
  %s19 = scalar_select 0, %s18, %s16
  $region1: #{tpu_custom_call.1} parent=0
    #allocation3 [shape = 'u8[2048]{0}', space=vmem, size = 0x800, scoped, tag = 'input window, operand 0, single buffered']
    #allocation4 [shape = 's32[1]{0}', space=sflag, size = 0x4, scoped, tag = 'scoped memory for tpu_custom_call.1']
    #allocation5 [shape = 's32[1]{0}', space=sflag, size = 0x4, scoped, tag = 'scoped memory for tpu_custom_call.1']
    #allocation6 [shape = 'u8[32768]{0}', space=vmem, size = 0x8000, scoped, tag = 'input window, operand 1, single buffered']
    #allocation7 [shape = 's32[1]{0}', space=sflag, size = 0x4, scoped, tag = 'scoped memory for tpu_custom_call.1']
    #allocation8 [shape = 'u8[32768]{0}', space=vmem, size = 0x8000, scoped, tag = 'input window, operand 5, single buffered']
    #allocation9 [shape = 'u8[32768]{0}', space=vmem, size = 0x8000, scoped, tag = 'input window, operand 9, single buffered']
    #allocation10 [shape = 's32[1]{0}', space=sflag, size = 0x4, scoped, tag = 'scoped memory for tpu_custom_call.1']
    #allocation11 [shape = 'u8[32768]{0}', space=vmem, size = 0x8000, scoped, tag = 'input window, operand 13, single buffered']
    #allocation12 [shape = 'u8[4096]{0}', space=vmem, size = 0x1000, scoped, tag = 'output window, operand 0, single buffered']
    %20 = vsyncpa [#allocation4], 0
    %21 = vsyncpa [#allocation7], 0
    %22 = vsyncpa [#allocation10], 0
    %23 = vsyncpa [#allocation5], 0
    // Predicated region
    $region2: #{tpu_custom_call.1} parent=1 // pred_check
      _
    $region3: #{tpu_custom_call.1} parent=1 // pred_check_branch
      %25 = sbr.rel (0) target = $region5
    $region4: #{tpu_custom_call.1} parent=1 // pred_region
      %s27 = ssub.s32 64, 64
      %28 = vsyncadd [#allocation4], %s27
      %s30 = sshll.u32 [#allocation3], 4
      %s31 = int_to_ptr.vmem [resolvable:$true] %s30
      %33 = dma.hbm_to_vmem [thread:$0]  %s0, 64, %s31, [#allocation4]
    $region5: #{tpu_custom_call.1} parent=1 // pred_fallthru
      _
    // Predicated region
    $region6: #{tpu_custom_call.1} parent=1 // pred_check
      _
    $region7: #{tpu_custom_call.1} parent=1 // pred_check_branch
      %35 = sbr.rel (0) target = $region9
    $region8: #{tpu_custom_call.1} parent=1 // pred_region
      %s37 = ssub.s32 1024, 1024
      %38 = vsyncadd [#allocation7], %s37
      %s39 = sshll.u32 [#allocation6], 4
      %s40 = int_to_ptr.vmem [resolvable:$true] %s39
      %45 = dma.hbm_to_vmem [thread:$0]  %s1, 1024, %s40, [#allocation7], 64, 64, 4
    $region9: #{tpu_custom_call.1} parent=1 // pred_fallthru
      _
    // Predicated region
    $region10: #{tpu_custom_call.1} parent=1 // pred_check
      _
    $region11: #{tpu_custom_call.1} parent=1 // pred_check_branch
      %47 = sbr.rel (0) target = $region13
    $region12: #{tpu_custom_call.1} parent=1 // pred_region
      _
    $region13: #{tpu_custom_call.1} parent=1 // pred_fallthru
      _
    // Predicated region
    $region14: #{tpu_custom_call.1} parent=1 // pred_check
      _
    $region15: #{tpu_custom_call.1} parent=1 // pred_check_branch
      %49 = sbr.rel (0) target = $region17
    $region16: #{tpu_custom_call.1} parent=1 // pred_region
      _
    $region17: #{tpu_custom_call.1} parent=1 // pred_fallthru
      _
    // Predicated region
    $region18: #{tpu_custom_call.1} parent=1 // pred_check
      _
    $region19: #{tpu_custom_call.1} parent=1 // pred_check_branch
      %51 = sbr.rel (0) target = $region21
    $region20: #{tpu_custom_call.1} parent=1 // pred_region
      _
    $region21: #{tpu_custom_call.1} parent=1 // pred_fallthru
      _
    // Predicated region
    $region22: #{tpu_custom_call.1} parent=1 // pred_check
      _
    $region23: #{tpu_custom_call.1} parent=1 // pred_check_branch
      %53 = sbr.rel (0) target = $region25
    $region24: #{tpu_custom_call.1} parent=1 // pred_region
      %s55 = ssub.s32 1024, 1024
      %56 = vsyncadd [#allocation7], %s55
      %s57 = sshll.u32 [#allocation8], 4
      %s58 = int_to_ptr.vmem [resolvable:$true] %s57
      %63 = dma.hbm_to_vmem [thread:$0]  %s5, 1024, %s58, [#allocation7], 64, 64, 4
    $region25: #{tpu_custom_call.1} parent=1 // pred_fallthru
      _
    // Predicated region
    $region26: #{tpu_custom_call.1} parent=1 // pred_check
      _
    $region27: #{tpu_custom_call.1} parent=1 // pred_check_branch
      %65 = sbr.rel (0) target = $region29
    $region28: #{tpu_custom_call.1} parent=1 // pred_region
      _
    $region29: #{tpu_custom_call.1} parent=1 // pred_fallthru
      _
    // Predicated region
    $region30: #{tpu_custom_call.1} parent=1 // pred_check
      _
    $region31: #{tpu_custom_call.1} parent=1 // pred_check_branch
      %67 = sbr.rel (0) target = $region33
    $region32: #{tpu_custom_call.1} parent=1 // pred_region
      _
    $region33: #{tpu_custom_call.1} parent=1 // pred_fallthru
      _
    // Predicated region
    $region34: #{tpu_custom_call.1} parent=1 // pred_check
      _
    $region35: #{tpu_custom_call.1} parent=1 // pred_check_branch
      %69 = sbr.rel (0) target = $region37
    $region36: #{tpu_custom_call.1} parent=1 // pred_region
      _
    $region37: #{tpu_custom_call.1} parent=1 // pred_fallthru
      _
    // Predicated region
    $region38: #{tpu_custom_call.1} parent=1 // pred_check
      _
    $region39: #{tpu_custom_call.1} parent=1 // pred_check_branch
      %71 = sbr.rel (0) target = $region41
    $region40: #{tpu_custom_call.1} parent=1 // pred_region
      %s73 = ssub.s32 1024, 1024
      %74 = vsyncadd [#allocation10], %s73
      %s75 = sshll.u32 [#allocation9], 4
      %s76 = int_to_ptr.vmem [resolvable:$true] %s75
      %81 = dma.hbm_to_vmem [thread:$0]  %s9, 1024, %s76, [#allocation10], 64, 64, 4
    $region41: #{tpu_custom_call.1} parent=1 // pred_fallthru
      _
    // Predicated region
    $region42: #{tpu_custom_call.1} parent=1 // pred_check
      _
    $region43: #{tpu_custom_call.1} parent=1 // pred_check_branch
      %83 = sbr.rel (0) target = $region45
    $region44: #{tpu_custom_call.1} parent=1 // pred_region
      _
    $region45: #{tpu_custom_call.1} parent=1 // pred_fallthru
      _
    // Predicated region
    $region46: #{tpu_custom_call.1} parent=1 // pred_check
      _
    $region47: #{tpu_custom_call.1} parent=1 // pred_check_branch
      %85 = sbr.rel (0) target = $region49
    $region48: #{tpu_custom_call.1} parent=1 // pred_region
      _
    $region49: #{tpu_custom_call.1} parent=1 // pred_fallthru
      _
    // Predicated region
    $region50: #{tpu_custom_call.1} parent=1 // pred_check
      _
    $region51: #{tpu_custom_call.1} parent=1 // pred_check_branch
      %87 = sbr.rel (0) target = $region53
    $region52: #{tpu_custom_call.1} parent=1 // pred_region
      _
    $region53: #{tpu_custom_call.1} parent=1 // pred_fallthru
      _
    // Predicated region
    $region54: #{tpu_custom_call.1} parent=1 // pred_check
      _
    $region55: #{tpu_custom_call.1} parent=1 // pred_check_branch
      %89 = sbr.rel (0) target = $region57
    $region56: #{tpu_custom_call.1} parent=1 // pred_region
      %s91 = ssub.s32 1024, 1024
      %92 = vsyncadd [#allocation10], %s91
      %s93 = sshll.u32 [#allocation11], 4
      %s94 = int_to_ptr.vmem [resolvable:$true] %s93
      %99 = dma.hbm_to_vmem [thread:$0]  %s13, 1024, %s94, [#allocation10], 64, 64, 4
    $region57: #{tpu_custom_call.1} parent=1 // pred_fallthru
      _
    // Predicated region
    $region58: #{tpu_custom_call.1} parent=1 // pred_check
      _
    $region59: #{tpu_custom_call.1} parent=1 // pred_check_branch
      %101 = sbr.rel (0) target = $region61
    $region60: #{tpu_custom_call.1} parent=1 // pred_region
      _
    $region61: #{tpu_custom_call.1} parent=1 // pred_fallthru
      _
    // Predicated region
    $region62: #{tpu_custom_call.1} parent=1 // pred_check
      _
    $region63: #{tpu_custom_call.1} parent=1 // pred_check_branch
      %103 = sbr.rel (0) target = $region65
    $region64: #{tpu_custom_call.1} parent=1 // pred_region
      %104 = dma.done [#allocation4], 64
    $region65: #{tpu_custom_call.1} parent=1 // pred_fallthru
      _
    // Predicated region
    $region66: #{tpu_custom_call.1} parent=1 // pred_check
      _
    $region67: #{tpu_custom_call.1} parent=1 // pred_check_branch
      %106 = sbr.rel (0) target = $region69
    $region68: #{tpu_custom_call.1} parent=1 // pred_region
      %107 = dma.done [#allocation7], 1024
    $region69: #{tpu_custom_call.1} parent=1 // pred_fallthru
      _
    // Predicated region
    $region70: #{tpu_custom_call.1} parent=1 // pred_check
      _
    $region71: #{tpu_custom_call.1} parent=1 // pred_check_branch
      %109 = sbr.rel (0) target = $region73
    $region72: #{tpu_custom_call.1} parent=1 // pred_region
      %110 = dma.done [#allocation7], 1024
    $region73: #{tpu_custom_call.1} parent=1 // pred_fallthru
      _
    // Predicated region
    $region74: #{tpu_custom_call.1} parent=1 // pred_check
      _
    $region75: #{tpu_custom_call.1} parent=1 // pred_check_branch
      %112 = sbr.rel (0) target = $region77
    $region76: #{tpu_custom_call.1} parent=1 // pred_region
      %113 = dma.done [#allocation10], 1024
    $region77: #{tpu_custom_call.1} parent=1 // pred_fallthru
      _
    // Predicated region
    $region78: #{tpu_custom_call.1} parent=1 // pred_check
      _
    $region79: #{tpu_custom_call.1} parent=1 // pred_check_branch
      %115 = sbr.rel (0) target = $region81
    $region80: #{tpu_custom_call.1} parent=1 // pred_region
      %116 = dma.done [#allocation10], 1024
    $region81: #{tpu_custom_call.1} parent=1 // pred_fallthru
      _
    %p118 = scmp.eq.s32.totalorder 0, 0
    // Predicated region
    $region82: #{tpu_custom_call.1} parent=1 // pred_check
      %p119 = pneg %p118
    $region83: #{tpu_custom_call.1} parent=1 // pred_check_branch
      %121 = sbr.rel (%p119) target = $region85
    $region84: #{tpu_custom_call.1} parent=1 // pred_region
      %v122 = vlaneseq
      %v123 = vand.u32 %v122, 127
      %vm124 = vcmp.lt.s32.totalorder %v123, 64
      %v125 = vsel %vm124, 1, 0
      %v126 = vcvt.s32.f32 %v125
      %v127 = vld [vmem:[#allocation3] sm:$0xf]
      %v128 = vld [vmem:[#allocation6] sm:$0xf]
      %v129 = vld [vmem:[#allocation6 + $0x4] sm:$0xf]
      %v130 = vld [vmem:[#allocation6 + $0x8] sm:$0xf]
      %v131 = vld [vmem:[#allocation6 + $0xc] sm:$0xf]
      %v132 = vld [vmem:[#allocation6 + $0x10] sm:$0xf]
      %v133 = vld [vmem:[#allocation6 + $0x14] sm:$0xf]
      %v134 = vld [vmem:[#allocation6 + $0x18] sm:$0xf]
      %v135 = vld [vmem:[#allocation6 + $0x1c] sm:$0xf]
      %v136 = vld [vmem:[#allocation6 + $0x20] sm:$0xf]
      %v137 = vld [vmem:[#allocation6 + $0x24] sm:$0xf]
      %v138 = vld [vmem:[#allocation6 + $0x28] sm:$0xf]
      %v139 = vld [vmem:[#allocation6 + $0x2c] sm:$0xf]
      %v140 = vld [vmem:[#allocation6 + $0x30] sm:$0xf]
      %v141 = vld [vmem:[#allocation6 + $0x34] sm:$0xf]
      %v142 = vld [vmem:[#allocation6 + $0x38] sm:$0xf]
      %v143 = vld [vmem:[#allocation6 + $0x3c] sm:$0xf]
      %v144 = vld [vmem:[%s2] sm:$0x1]
      %v146 = vlaneseq
      %v147 = vshrl.u32 %v146, 7
      %v148 = vsub.s32 0, %v147
      %v149 = vrot.slane %v144, %v148
      %v167 = vunpack.c.l.b16 %v128
      %v168 = vunpack.c.l.b16 %v129
      %v169 = vunpack.c.l.b16 %v130
      %v170 = vunpack.c.l.b16 %v131
      %v171 = vunpack.c.l.b16 %v132
      %v172 = vunpack.c.l.b16 %v133
      %v173 = vunpack.c.l.b16 %v134
      %v174 = vunpack.c.l.b16 %v135
      %v175 = vunpack.c.l.b16 %v136
      %v176 = vunpack.c.l.b16 %v137
      %v177 = vunpack.c.l.b16 %v138
      %v178 = vunpack.c.l.b16 %v139
      %v179 = vunpack.c.l.b16 %v140
      %v180 = vunpack.c.l.b16 %v141
      %v181 = vunpack.c.l.b16 %v142
      %v182 = vunpack.c.l.b16 %v143
      %v183 = vpack.c.b16 %v168, %v167
      %v184 = vpack.c.b16 %v170, %v169
      %v185 = vpack.c.b16 %v172, %v171
      %v186 = vpack.c.b16 %v174, %v173
      %v187 = vpack.c.b16 %v176, %v175
      %v188 = vpack.c.b16 %v178, %v177
      %v189 = vpack.c.b16 %v180, %v179
      %v190 = vpack.c.b16 %v182, %v181
      %199 = vmatprep.subr.bf16.mxu0 0
      %200 = vmatpush1.bf16.msra.mxu0 %v190
      %201 = vmatprep.subr.bf16.mxu0 0
      %202 = vmatpush1.bf16.msra.mxu0 %v189
      %203 = vmatprep.subr.bf16.mxu0 0
      %204 = vmatpush1.bf16.msra.mxu0 %v188
      %205 = vmatprep.subr.bf16.mxu0 0
      %206 = vmatpush1.bf16.msra.mxu0 %v187
      %207 = vmatprep.subr.bf16.mxu0 0
      %208 = vmatpush1.bf16.msra.mxu0 %v186
      %209 = vmatprep.subr.bf16.mxu0 0
      %210 = vmatpush1.bf16.msra.mxu0 %v185
      %211 = vmatprep.subr.bf16.mxu0 0
      %212 = vmatpush1.bf16.msra.mxu0 %v184
      %213 = vmatprep.subr.bf16.mxu0 0
      %214 = vmatpush1.bf16.msra.mxu0 %v183
      %215 = vmatprep.subr.bf16.mxu0 0
      %216 = vmatpush2.bf16.msra.mxu0 0
      %217 = vmatprep.subr.bf16.mxu0 0
      %218 = vmatpush2.bf16.msra.mxu0 0
      %219 = vmatprep.subr.bf16.mxu0 0
      %220 = vmatpush2.bf16.msra.mxu0 0
      %221 = vmatprep.subr.bf16.mxu0 0
      %222 = vmatpush2.bf16.msra.mxu0 0
      %223 = vmatprep.subr.bf16.mxu0 0
      %224 = vmatpush2.bf16.msra.mxu0 0
      %225 = vmatprep.subr.bf16.mxu0 0
      %226 = vmatpush2.bf16.msra.mxu0 0
      %227 = vmatprep.subr.bf16.mxu0 0
      %228 = vmatpush2.bf16.msra.mxu0 0
      %229 = vmatprep.subr.bf16.mxu0 0
      %230 = vmatpush2.bf16.msra.mxu0 0
      %231 = vmatprep.mubr.bf16.mxu0 0
      %232 = vmatmul.mubr.bf16.gmra.mxu0 %v127
      %v233 = vpop.f32.mrf.mxu0
      %v234 = vadd.f32 %v149, %v233
      %v235 = vpop.f32.mrf.mxu0
      %v236 = vpop.f32.mrf.mxu0
      %v237 = vpop.f32.mrf.mxu0
      %238 = vdwg.mxu0
      %vm239 = vcmp.gt.f32.partialorder %v234, 0.0
      %v240 = vmul.f32 %v234, 0.01
      %v241 = vsel %vm239, %v234, %v240
      %v242 = vld [vmem:[%s3] sm:$0x1]
      %v243 = vld [vmem:[%s4] sm:$0x1]
      %v244 = vmul.f32 %v241, %v126
      %245 = vadd.xlane.f32.xlu0 %v244
      %v246 = vpop.xlane.xlu0 %245
      %v247 = vmul.f32 %v246, 0.015625
      %v248 = vsub.f32 %v244, %v247
      %v249 = vmul.f32 %v248, %v126
      %v250 = vmul.f32 %v249, %v249
      %251 = vadd.xlane.f32.xlu0 %v250
      %v252 = vpop.xlane.xlu0 %251
      %v253 = vmul.f32 %v252, 0.015625
      %v254 = vadd.f32 %v253, 1e-05
      %v255 = vrsqrt.pop %v254
      %v256 = vmul.f32 %v248, %v255
      %v258 = vlaneseq
      %v259 = vshrl.u32 %v258, 7
      %v260 = vsub.s32 0, %v259
      %v261 = vrot.slane %v242, %v260
      %v263 = vmul.f32 %v256, %v261
      %v265 = vlaneseq
      %v266 = vshrl.u32 %v265, 7
      %v267 = vsub.s32 0, %v266
      %v268 = vrot.slane %v243, %v267
      %v270 = vadd.f32 %v263, %v268
      %v271 = vpack.c.bf16 %v270, %v270
      %v272 = vld [vmem:[#allocation8] sm:$0xf]
      %v273 = vld [vmem:[#allocation8 + $0x4] sm:$0xf]
      %v274 = vld [vmem:[#allocation8 + $0x8] sm:$0xf]
      %v275 = vld [vmem:[#allocation8 + $0xc] sm:$0xf]
      %v276 = vld [vmem:[#allocation8 + $0x10] sm:$0xf]
      %v277 = vld [vmem:[#allocation8 + $0x14] sm:$0xf]
      %v278 = vld [vmem:[#allocation8 + $0x18] sm:$0xf]
      %v279 = vld [vmem:[#allocation8 + $0x1c] sm:$0xf]
      %v280 = vld [vmem:[#allocation8 + $0x20] sm:$0xf]
      %v281 = vld [vmem:[#allocation8 + $0x24] sm:$0xf]
      %v282 = vld [vmem:[#allocation8 + $0x28] sm:$0xf]
      %v283 = vld [vmem:[#allocation8 + $0x2c] sm:$0xf]
      %v284 = vld [vmem:[#allocation8 + $0x30] sm:$0xf]
      %v285 = vld [vmem:[#allocation8 + $0x34] sm:$0xf]
      %v286 = vld [vmem:[#allocation8 + $0x38] sm:$0xf]
      %v287 = vld [vmem:[#allocation8 + $0x3c] sm:$0xf]
      %v288 = vld [vmem:[%s6] sm:$0x1]
      %v290 = vlaneseq
      %v291 = vshrl.u32 %v290, 7
      %v292 = vsub.s32 0, %v291
      %v293 = vrot.slane %v288, %v292
      %v311 = vunpack.c.l.b16 %v272
      %v312 = vunpack.c.l.b16 %v273
      %v313 = vunpack.c.l.b16 %v274
      %v314 = vunpack.c.l.b16 %v275
      %v315 = vunpack.c.l.b16 %v276
      %v316 = vunpack.c.l.b16 %v277
      %v317 = vunpack.c.l.b16 %v278
      %v318 = vunpack.c.l.b16 %v279
      %v319 = vunpack.c.l.b16 %v280
      %v320 = vunpack.c.l.b16 %v281
      %v321 = vunpack.c.l.b16 %v282
      %v322 = vunpack.c.l.b16 %v283
      %v323 = vunpack.c.l.b16 %v284
      %v324 = vunpack.c.l.b16 %v285
      %v325 = vunpack.c.l.b16 %v286
      %v326 = vunpack.c.l.b16 %v287
      %v327 = vpack.c.b16 %v312, %v311
      %v328 = vpack.c.b16 %v314, %v313
      %v329 = vpack.c.b16 %v316, %v315
      %v330 = vpack.c.b16 %v318, %v317
      %v331 = vpack.c.b16 %v320, %v319
      %v332 = vpack.c.b16 %v322, %v321
      %v333 = vpack.c.b16 %v324, %v323
      %v334 = vpack.c.b16 %v326, %v325
      %343 = vmatprep.subr.bf16.mxu0 0
      %344 = vmatpush1.bf16.msra.mxu0 %v334
      %345 = vmatprep.subr.bf16.mxu0 0
      %346 = vmatpush1.bf16.msra.mxu0 %v333
      %347 = vmatprep.subr.bf16.mxu0 0
      %348 = vmatpush1.bf16.msra.mxu0 %v332
      %349 = vmatprep.subr.bf16.mxu0 0
      %350 = vmatpush1.bf16.msra.mxu0 %v331
      %351 = vmatprep.subr.bf16.mxu0 0
      %352 = vmatpush1.bf16.msra.mxu0 %v330
      %353 = vmatprep.subr.bf16.mxu0 0
      %354 = vmatpush1.bf16.msra.mxu0 %v329
      %355 = vmatprep.subr.bf16.mxu0 0
      %356 = vmatpush1.bf16.msra.mxu0 %v328
      %357 = vmatprep.subr.bf16.mxu0 0
      %358 = vmatpush1.bf16.msra.mxu0 %v327
      %359 = vmatprep.subr.bf16.mxu0 0
      %360 = vmatpush2.bf16.msra.mxu0 0
      %361 = vmatprep.subr.bf16.mxu0 0
      %362 = vmatpush2.bf16.msra.mxu0 0
      %363 = vmatprep.subr.bf16.mxu0 0
      %364 = vmatpush2.bf16.msra.mxu0 0
      %365 = vmatprep.subr.bf16.mxu0 0
      %366 = vmatpush2.bf16.msra.mxu0 0
      %367 = vmatprep.subr.bf16.mxu0 0
      %368 = vmatpush2.bf16.msra.mxu0 0
      %369 = vmatprep.subr.bf16.mxu0 0
      %370 = vmatpush2.bf16.msra.mxu0 0
      %371 = vmatprep.subr.bf16.mxu0 0
      %372 = vmatpush2.bf16.msra.mxu0 0
      %373 = vmatprep.subr.bf16.mxu0 0
      %374 = vmatpush2.bf16.msra.mxu0 0
      %375 = vmatprep.mubr.bf16.mxu0 0
      %376 = vmatmul.mubr.bf16.gmra.mxu0 %v271
      %v377 = vpop.f32.mrf.mxu0
      %v378 = vadd.f32 %v293, %v377
      %v379 = vpop.f32.mrf.mxu0
      %v380 = vpop.f32.mrf.mxu0
      %v381 = vpop.f32.mrf.mxu0
      %382 = vdwg.mxu0
      %vm383 = vcmp.gt.f32.partialorder %v378, 0.0
      %v384 = vmul.f32 %v378, 0.01
      %v385 = vsel %vm383, %v378, %v384
      %v386 = vld [vmem:[%s7] sm:$0x1]
      %v387 = vld [vmem:[%s8] sm:$0x1]
      %v388 = vmul.f32 %v385, %v126
      %389 = vadd.xlane.f32.xlu0 %v388
      %v390 = vpop.xlane.xlu0 %389
      %v391 = vmul.f32 %v390, 0.015625
      %v392 = vsub.f32 %v388, %v391
      %v393 = vmul.f32 %v392, %v126
      %v394 = vmul.f32 %v393, %v393
      %395 = vadd.xlane.f32.xlu0 %v394
      %v396 = vpop.xlane.xlu0 %395
      %v397 = vmul.f32 %v396, 0.015625
      %v398 = vadd.f32 %v397, 1e-05
      %v399 = vrsqrt.pop %v398
      %v400 = vmul.f32 %v392, %v399
      %v402 = vlaneseq
      %v403 = vshrl.u32 %v402, 7
      %v404 = vsub.s32 0, %v403
      %v405 = vrot.slane %v386, %v404
      %v407 = vmul.f32 %v400, %v405
      %v409 = vlaneseq
      %v410 = vshrl.u32 %v409, 7
      %v411 = vsub.s32 0, %v410
      %v412 = vrot.slane %v387, %v411
      %v414 = vadd.f32 %v407, %v412
      %v415 = vpack.c.bf16 %v414, %v414
      %v416 = vld [vmem:[#allocation9] sm:$0xf]
      %v417 = vld [vmem:[#allocation9 + $0x4] sm:$0xf]
      %v418 = vld [vmem:[#allocation9 + $0x8] sm:$0xf]
      %v419 = vld [vmem:[#allocation9 + $0xc] sm:$0xf]
      %v420 = vld [vmem:[#allocation9 + $0x10] sm:$0xf]
      %v421 = vld [vmem:[#allocation9 + $0x14] sm:$0xf]
      %v422 = vld [vmem:[#allocation9 + $0x18] sm:$0xf]
      %v423 = vld [vmem:[#allocation9 + $0x1c] sm:$0xf]
      %v424 = vld [vmem:[#allocation9 + $0x20] sm:$0xf]
      %v425 = vld [vmem:[#allocation9 + $0x24] sm:$0xf]
      %v426 = vld [vmem:[#allocation9 + $0x28] sm:$0xf]
      %v427 = vld [vmem:[#allocation9 + $0x2c] sm:$0xf]
      %v428 = vld [vmem:[#allocation9 + $0x30] sm:$0xf]
      %v429 = vld [vmem:[#allocation9 + $0x34] sm:$0xf]
      %v430 = vld [vmem:[#allocation9 + $0x38] sm:$0xf]
      %v431 = vld [vmem:[#allocation9 + $0x3c] sm:$0xf]
      %v432 = vld [vmem:[%s10] sm:$0x1]
      %v434 = vlaneseq
      %v435 = vshrl.u32 %v434, 7
      %v436 = vsub.s32 0, %v435
      %v437 = vrot.slane %v432, %v436
      %v455 = vunpack.c.l.b16 %v416
      %v456 = vunpack.c.l.b16 %v417
      %v457 = vunpack.c.l.b16 %v418
      %v458 = vunpack.c.l.b16 %v419
      %v459 = vunpack.c.l.b16 %v420
      %v460 = vunpack.c.l.b16 %v421
      %v461 = vunpack.c.l.b16 %v422
      %v462 = vunpack.c.l.b16 %v423
      %v463 = vunpack.c.l.b16 %v424
      %v464 = vunpack.c.l.b16 %v425
      %v465 = vunpack.c.l.b16 %v426
      %v466 = vunpack.c.l.b16 %v427
      %v467 = vunpack.c.l.b16 %v428
      %v468 = vunpack.c.l.b16 %v429
      %v469 = vunpack.c.l.b16 %v430
      %v470 = vunpack.c.l.b16 %v431
      %v471 = vpack.c.b16 %v456, %v455
      %v472 = vpack.c.b16 %v458, %v457
      %v473 = vpack.c.b16 %v460, %v459
      %v474 = vpack.c.b16 %v462, %v461
      %v475 = vpack.c.b16 %v464, %v463
      %v476 = vpack.c.b16 %v466, %v465
      %v477 = vpack.c.b16 %v468, %v467
      %v478 = vpack.c.b16 %v470, %v469
      %487 = vmatprep.subr.bf16.mxu0 0
      %488 = vmatpush1.bf16.msra.mxu0 %v478
      %489 = vmatprep.subr.bf16.mxu0 0
      %490 = vmatpush1.bf16.msra.mxu0 %v477
      %491 = vmatprep.subr.bf16.mxu0 0
      %492 = vmatpush1.bf16.msra.mxu0 %v476
      %493 = vmatprep.subr.bf16.mxu0 0
      %494 = vmatpush1.bf16.msra.mxu0 %v475
      %495 = vmatprep.subr.bf16.mxu0 0
      %496 = vmatpush1.bf16.msra.mxu0 %v474
      %497 = vmatprep.subr.bf16.mxu0 0
      %498 = vmatpush1.bf16.msra.mxu0 %v473
      %499 = vmatprep.subr.bf16.mxu0 0
      %500 = vmatpush1.bf16.msra.mxu0 %v472
      %501 = vmatprep.subr.bf16.mxu0 0
      %502 = vmatpush1.bf16.msra.mxu0 %v471
      %503 = vmatprep.subr.bf16.mxu0 0
      %504 = vmatpush2.bf16.msra.mxu0 0
      %505 = vmatprep.subr.bf16.mxu0 0
      %506 = vmatpush2.bf16.msra.mxu0 0
      %507 = vmatprep.subr.bf16.mxu0 0
      %508 = vmatpush2.bf16.msra.mxu0 0
      %509 = vmatprep.subr.bf16.mxu0 0
      %510 = vmatpush2.bf16.msra.mxu0 0
      %511 = vmatprep.subr.bf16.mxu0 0
      %512 = vmatpush2.bf16.msra.mxu0 0
      %513 = vmatprep.subr.bf16.mxu0 0
      %514 = vmatpush2.bf16.msra.mxu0 0
      %515 = vmatprep.subr.bf16.mxu0 0
      %516 = vmatpush2.bf16.msra.mxu0 0
      %517 = vmatprep.subr.bf16.mxu0 0
      %518 = vmatpush2.bf16.msra.mxu0 0
      %519 = vmatprep.mubr.bf16.mxu0 0
      %520 = vmatmul.mubr.bf16.gmra.mxu0 %v415
      %v521 = vpop.f32.mrf.mxu0
      %v522 = vadd.f32 %v437, %v521
      %v523 = vpop.f32.mrf.mxu0
      %v524 = vpop.f32.mrf.mxu0
      %v525 = vpop.f32.mrf.mxu0
      %526 = vdwg.mxu0
      %vm527 = vcmp.gt.f32.partialorder %v522, 0.0
      %v528 = vmul.f32 %v522, 0.01
      %v529 = vsel %vm527, %v522, %v528
      %v530 = vld [vmem:[%s11] sm:$0x1]
      %v531 = vld [vmem:[%s12] sm:$0x1]
      %v532 = vmul.f32 %v529, %v126
      %533 = vadd.xlane.f32.xlu0 %v532
      %v534 = vpop.xlane.xlu0 %533
      %v535 = vmul.f32 %v534, 0.015625
      %v536 = vsub.f32 %v532, %v535
      %v537 = vmul.f32 %v536, %v126
      %v538 = vmul.f32 %v537, %v537
      %539 = vadd.xlane.f32.xlu0 %v538
      %v540 = vpop.xlane.xlu0 %539
      %v541 = vmul.f32 %v540, 0.015625
      %v542 = vadd.f32 %v541, 1e-05
      %v543 = vrsqrt.pop %v542
      %v544 = vmul.f32 %v536, %v543
      %v546 = vlaneseq
      %v547 = vshrl.u32 %v546, 7
      %v548 = vsub.s32 0, %v547
      %v549 = vrot.slane %v530, %v548
      %v551 = vmul.f32 %v544, %v549
      %v553 = vlaneseq
      %v554 = vshrl.u32 %v553, 7
      %v555 = vsub.s32 0, %v554
      %v556 = vrot.slane %v531, %v555
      %v558 = vadd.f32 %v551, %v556
      %559 = vst [vmem:[#allocation2] sm:$0xff] %v558
    $region85: #{tpu_custom_call.1} parent=1 // pred_fallthru
      _
    %v560 = vld [vmem:[#allocation2] sm:$0xff]
    %v561 = vpack.c.bf16 %v560, %v560
    %v562 = vld [vmem:[#allocation11] sm:$0xf]
    %v563 = vld [vmem:[#allocation11 + $0x4] sm:$0xf]
    %v564 = vld [vmem:[#allocation11 + $0x8] sm:$0xf]
    %v565 = vld [vmem:[#allocation11 + $0xc] sm:$0xf]
    %v566 = vld [vmem:[#allocation11 + $0x10] sm:$0xf]
    %v567 = vld [vmem:[#allocation11 + $0x14] sm:$0xf]
    %v568 = vld [vmem:[#allocation11 + $0x18] sm:$0xf]
    %v569 = vld [vmem:[#allocation11 + $0x1c] sm:$0xf]
    %v570 = vld [vmem:[#allocation11 + $0x20] sm:$0xf]
    %v571 = vld [vmem:[#allocation11 + $0x24] sm:$0xf]
    %v572 = vld [vmem:[#allocation11 + $0x28] sm:$0xf]
    %v573 = vld [vmem:[#allocation11 + $0x2c] sm:$0xf]
    %v574 = vld [vmem:[#allocation11 + $0x30] sm:$0xf]
    %v575 = vld [vmem:[#allocation11 + $0x34] sm:$0xf]
    %v576 = vld [vmem:[#allocation11 + $0x38] sm:$0xf]
    %v577 = vld [vmem:[#allocation11 + $0x3c] sm:$0xf]
    %v578 = vld [vmem:[%s14] sm:$0x1]
    %v580 = vlaneseq
    %v581 = vshrl.u32 %v580, 7
    %v582 = vsub.s32 0, %v581
    %v583 = vrot.slane %v578, %v582
    %v601 = vunpack.c.l.b16 %v562
    %v602 = vunpack.c.l.b16 %v563
    %v603 = vunpack.c.l.b16 %v564
    %v604 = vunpack.c.l.b16 %v565
    %v605 = vunpack.c.l.b16 %v566
    %v606 = vunpack.c.l.b16 %v567
    %v607 = vunpack.c.l.b16 %v568
    %v608 = vunpack.c.l.b16 %v569
    %v609 = vunpack.c.l.b16 %v570
    %v610 = vunpack.c.l.b16 %v571
    %v611 = vunpack.c.l.b16 %v572
    %v612 = vunpack.c.l.b16 %v573
    %v613 = vunpack.c.l.b16 %v574
    %v614 = vunpack.c.l.b16 %v575
    %v615 = vunpack.c.l.b16 %v576
    %v616 = vunpack.c.l.b16 %v577
    %v617 = vpack.c.b16 %v602, %v601
    %v618 = vpack.c.b16 %v604, %v603
    %v619 = vpack.c.b16 %v606, %v605
    %v620 = vpack.c.b16 %v608, %v607
    %v621 = vpack.c.b16 %v610, %v609
    %v622 = vpack.c.b16 %v612, %v611
    %v623 = vpack.c.b16 %v614, %v613
    %v624 = vpack.c.b16 %v616, %v615
    %633 = vmatprep.subr.bf16.mxu0 0
    %634 = vmatpush1.bf16.msra.mxu0 %v624
    %635 = vmatprep.subr.bf16.mxu0 0
    %636 = vmatpush1.bf16.msra.mxu0 %v623
    %637 = vmatprep.subr.bf16.mxu0 0
    %638 = vmatpush1.bf16.msra.mxu0 %v622
    %639 = vmatprep.subr.bf16.mxu0 0
    %640 = vmatpush1.bf16.msra.mxu0 %v621
    %641 = vmatprep.subr.bf16.mxu0 0
    %642 = vmatpush1.bf16.msra.mxu0 %v620
    %643 = vmatprep.subr.bf16.mxu0 0
    %644 = vmatpush1.bf16.msra.mxu0 %v619
    %645 = vmatprep.subr.bf16.mxu0 0
    %646 = vmatpush1.bf16.msra.mxu0 %v618
    %647 = vmatprep.subr.bf16.mxu0 0
    %648 = vmatpush1.bf16.msra.mxu0 %v617
    %649 = vmatprep.subr.bf16.mxu0 0
    %650 = vmatpush2.bf16.msra.mxu0 0
    %651 = vmatprep.subr.bf16.mxu0 0
    %652 = vmatpush2.bf16.msra.mxu0 0
    %653 = vmatprep.subr.bf16.mxu0 0
    %654 = vmatpush2.bf16.msra.mxu0 0
    %655 = vmatprep.subr.bf16.mxu0 0
    %656 = vmatpush2.bf16.msra.mxu0 0
    %657 = vmatprep.subr.bf16.mxu0 0
    %658 = vmatpush2.bf16.msra.mxu0 0
    %659 = vmatprep.subr.bf16.mxu0 0
    %660 = vmatpush2.bf16.msra.mxu0 0
    %661 = vmatprep.subr.bf16.mxu0 0
    %662 = vmatpush2.bf16.msra.mxu0 0
    %663 = vmatprep.subr.bf16.mxu0 0
    %664 = vmatpush2.bf16.msra.mxu0 0
    %665 = vmatprep.mubr.bf16.mxu0 0
    %666 = vmatmul.mubr.bf16.gmra.mxu0 %v561
    %v667 = vpop.f32.mrf.mxu0
    %v668 = vadd.f32 %v583, %v667
    %v669 = vpop.f32.mrf.mxu0
    %v670 = vpop.f32.mrf.mxu0
    %v671 = vpop.f32.mrf.mxu0
    %672 = vdwg.mxu0
    %vm673 = vcmp.gt.f32.partialorder %v668, 0.0
    %v674 = vmul.f32 %v668, 0.01
    %v675 = vsel %vm673, %v668, %v674
    %676 = vst [vmem:[#allocation12] sm:$0xff] %v675
    // Predicated region
    $region86: #{tpu_custom_call.1} parent=1 // pred_check
      _
    $region87: #{tpu_custom_call.1} parent=1 // pred_check_branch
      %678 = sbr.rel (0) target = $region89
    $region88: #{tpu_custom_call.1} parent=1 // pred_region
      %s680 = ssub.s32 128, 128
      %681 = vsyncadd [#allocation5], %s680
      %s683 = sshll.u32 [#allocation12], 4
      %s684 = int_to_ptr.vmem [resolvable:$true] %s683
      %686 = dma.vmem_to_hbm [thread:$0]  %s684, 128, %s15, [#allocation5]
    $region89: #{tpu_custom_call.1} parent=1 // pred_fallthru
      _
    // Predicated region
    $region90: #{tpu_custom_call.1} parent=1 // pred_check
      _
    $region91: #{tpu_custom_call.1} parent=1 // pred_check_branch
      %688 = sbr.rel (0) target = $region93
    $region92: #{tpu_custom_call.1} parent=1 // pred_region
      %689 = dma.done [#allocation5], 128
    $region93: #{tpu_custom_call.1} parent=1 // pred_fallthru
      _
    %690 = vsyncpa [#allocation4], 1
    %691 = vsyncpa [#allocation7], 1
    %692 = vsyncpa [#allocation10], 1
    %693 = vsyncpa [#allocation5], 1

</llo_original>
